<compile_context>
chip_gen: v7x
topology: tpu7x:2x2x1
jax: 0.10.0
libtpu: 0.0.40
codegen_flags: <defaults>
</compile_context>

<pallas_src>
import functools

import jax
import jax.numpy as jnp
from jax.experimental import pallas as pl
from jax.experimental.pallas import tpu as pltpu


def _round_up(n, m):
    return ((n + m - 1) // m) * m


def _quantumnet_kernel(x_ref, w1_ref, b1_ref, w2_ref, b2_ref, w3_ref, b3_ref,
                       o_ref):
    # fc1 + relu (f32 end-to-end; f32 accumulation on the MXU)
    h = jnp.dot(x_ref[...], w1_ref[...], preferred_element_type=jnp.float32)
    h = jnp.maximum(h + b1_ref[...], 0.0)
    # quantum_layer + sigmoid
    h = jnp.dot(h, w2_ref[...], preferred_element_type=jnp.float32)
    h = jax.nn.sigmoid(h + b2_ref[...])
    # fc2 (no activation)
    out = jnp.dot(h, w3_ref[...], preferred_element_type=jnp.float32)
    o_ref[...] = (out + b3_ref[...]).astype(o_ref.dtype)


@functools.partial(jax.jit, static_argnames=("block_b",))
def quantumnet_forward(x, params, *, block_b=2048):
    """x: [B, input_size] float32. params: dict of (W, b) per layer,
    W stored as [in, out], b as [1, out] (both float32, unpadded)."""
    w1, b1 = params["fc1"]
    w2, b2 = params["quantum_layer"]
    w3, b3 = params["fc2"]

    B, in_size = x.shape
    hid = w1.shape[1]
    out_size = w3.shape[1]

    # Batch tile: multiple of 8 sublanes; large enough to amortize per-step
    # overhead, but capped near B/2 so there are >= 2 grid steps for v7x's
    # two TensorCores whenever B allows it.
    half_b = -(-B // 2)  # ceil(B / 2)
    tb = min(block_b, _round_up(max(half_b, 1), 8))
    grid = (pl.cdiv(B, tb),)

    # Weights/biases: constant block index -> VMEM-resident across the grid.
    resident = lambda a: pl.BlockSpec(a.shape, lambda i: (0,) * a.ndim)

    # Logical (unpadded) cost estimate.
    flops = 2 * B * (in_size * hid + hid * hid + hid * out_size)
    bytes_accessed = (x.size * 4
                      + (w1.size + w2.size + w3.size) * 4
                      + (b1.size + b2.size + b3.size) * 4
                      + B * out_size * 4)

    return pl.pallas_call(
        _quantumnet_kernel,
        out_shape=jax.ShapeDtypeStruct((B, out_size), jnp.float32),
        grid=grid,
        in_specs=[pl.BlockSpec((tb, in_size), lambda i: (i, 0)),
                  resident(w1), resident(b1),
                  resident(w2), resident(b2),
                  resident(w3), resident(b3)],
        out_specs=pl.BlockSpec((tb, out_size), lambda i: (i, 0)),
        compiler_params=pltpu.CompilerParams(
            dimension_semantics=("parallel",)),
        cost_estimate=pl.CostEstimate(
            flops=flops,
            transcendentals=B * hid,
            bytes_accessed=bytes_accessed),
    )(x, w1, b1, w2, b2, w3, b3)


def init_params(key, input_size=16, hidden_size=64, output_size=8):
    """Deterministic init mimicking nn.Linear's uniform(-1/sqrt(fan_in), ...)."""
    def linear(k, fan_in, fan_out):
        kw, kb = jax.random.split(k)
        bound = 1.0 / jnp.sqrt(fan_in)
        # stored as [in, out] (transpose of PyTorch's [out, in])
        w = jax.random.uniform(kw, (fan_in, fan_out), jnp.float32, -bound, bound)
        b = jax.random.uniform(kb, (1, fan_out), jnp.float32, -bound, bound)
        return w, b

    k1, k2, k3 = jax.random.split(key, 3)
    return {
        "fc1": linear(k1, input_size, hidden_size),
        "quantum_layer": linear(k2, hidden_size, hidden_size),
        "fc2": linear(k3, hidden_size, output_size),
    }


def _reference_forward(x, params):
    w1, b1 = params["fc1"]
    w2, b2 = params["quantum_layer"]
    w3, b3 = params["fc2"]
    h = jnp.maximum(x @ w1 + b1, 0.0)
    h = jax.nn.sigmoid(h @ w2 + b2)
    return h @ w3 + b3


if __name__ == "__main__":
    key = jax.random.PRNGKey(0)
    k_params, k_x1, k_x2 = jax.random.split(key, 3)

    input_size, hidden_size, output_size = 16, 64, 8
    params = init_params(k_params, input_size, hidden_size, output_size)

    # Small batch (single grid step).
    batch = 8
    x = jax.random.normal(k_x1, (batch, input_size), jnp.float32)
    out = jax.block_until_ready(quantumnet_forward(x, params))
    ref = _reference_forward(x, params)
    assert out.shape == (batch, output_size)
    assert jnp.allclose(out, ref, atol=1e-2, rtol=1e-2), \
        float(jnp.max(jnp.abs(out - ref)))

    # Larger batch that is not a multiple of the tile (exercises the ragged
    # final block path and the >=2-grid-step tiling for v7x).
    batch2 = 300
    x2 = jax.random.normal(k_x2, (batch2, input_size), jnp.float32)
    out2 = jax.block_until_ready(quantumnet_forward(x2, params))
    ref2 = _reference_forward(x2, params)
    assert out2.shape == (batch2, output_size)
    assert jnp.allclose(out2, ref2, atol=1e-2, rtol=1e-2), \
        float(jnp.max(jnp.abs(out2 - ref2)))

    print("KERNEL_OK")
</pallas_src>

<mosaic_0001>
module attributes {stable_mosaic.version = 11 : i64} {
  func.func @_quantumnet_kernel(%arg0: i32, %arg1: memref<8x16xf32, #tpu.memory_space<vmem>>, %arg2: memref<16x64xf32, #tpu.memory_space<vmem>>, %arg3: memref<1x64xf32, #tpu.memory_space<vmem>>, %arg4: memref<64x64xf32, #tpu.memory_space<vmem>>, %arg5: memref<1x64xf32, #tpu.memory_space<vmem>>, %arg6: memref<64x8xf32, #tpu.memory_space<vmem>>, %arg7: memref<1x8xf32, #tpu.memory_space<vmem>>, %arg8: memref<8x8xf32, #tpu.memory_space<vmem>>) attributes {dimension_semantics = [#tpu.dimension_semantics<parallel>], iteration_bounds = array<i64: 1>, scalar_prefetch = 0 : i64, scratch_operands = 0 : i64, tpu.core_type = #tpu.core_type<tc>, window_params = [{transform_indices = @transform_0, window_bounds = array<i64: 8, 16>}, {pipeline_mode = #tpu.pipeline_mode<synchronous>, transform_indices = @transform_1, window_bounds = array<i64: 16, 64>}, {pipeline_mode = #tpu.pipeline_mode<synchronous>, transform_indices = @transform_2, window_bounds = array<i64: 1, 64>}, {pipeline_mode = #tpu.pipeline_mode<synchronous>, transform_indices = @transform_3, window_bounds = array<i64: 64, 64>}, {pipeline_mode = #tpu.pipeline_mode<synchronous>, transform_indices = @transform_4, window_bounds = array<i64: 1, 64>}, {pipeline_mode = #tpu.pipeline_mode<synchronous>, transform_indices = @transform_5, window_bounds = array<i64: 64, 8>}, {pipeline_mode = #tpu.pipeline_mode<synchronous>, transform_indices = @transform_6, window_bounds = array<i64: 1, 8>}, {transform_indices = @transform_7, window_bounds = array<i64: 8, 8>}]} {
    %c0 = arith.constant 0 : index
    %c0_0 = arith.constant 0 : index
    %0 = vector.load %arg1[%c0, %c0_0] : memref<8x16xf32, #tpu.memory_space<vmem>>, vector<8x16xf32>
    %c0_1 = arith.constant 0 : index
    %c0_2 = arith.constant 0 : index
    %1 = vector.load %arg2[%c0_1, %c0_2] : memref<16x64xf32, #tpu.memory_space<vmem>>, vector<16x64xf32>
    %cst = arith.constant dense<0.000000e+00> : vector<8x64xf32>
    %2 = tpu.matmul %0, %1, %cst {dimension_numbers = #tpu.dot_dimension_numbers<[1], [0], [0], [1], [0, 0, 1, 1], [], []>} : vector<8x16xf32>, vector<16x64xf32>, vector<8x64xf32> -> vector<8x64xf32>
    %c0_3 = arith.constant 0 : index
    %c0_4 = arith.constant 0 : index
    %3 = vector.load %arg3[%c0_3, %c0_4] : memref<1x64xf32, #tpu.memory_space<vmem>>, vector<1x64xf32>
    %4 = vector.broadcast %3 : vector<1x64xf32> to vector<8x64xf32>
    %5 = arith.addf %2, %4 : vector<8x64xf32>
    %cst_5 = arith.constant 0.000000e+00 : f32
    %6 = vector.broadcast %cst_5 : f32 to vector<8x64xf32>
    %7 = arith.maximumf %5, %6 : vector<8x64xf32>
    %c0_6 = arith.constant 0 : index
    %c0_7 = arith.constant 0 : index
    %8 = vector.load %arg4[%c0_6, %c0_7] : memref<64x64xf32, #tpu.memory_space<vmem>>, vector<64x64xf32>
    %cst_8 = arith.constant dense<0.000000e+00> : vector<8x64xf32>
    %9 = tpu.matmul %7, %8, %cst_8 {dimension_numbers = #tpu.dot_dimension_numbers<[1], [0], [0], [1], [0, 0, 1, 1], [], []>} : vector<8x64xf32>, vector<64x64xf32>, vector<8x64xf32> -> vector<8x64xf32>
    %c0_9 = arith.constant 0 : index
    %c0_10 = arith.constant 0 : index
    %10 = vector.load %arg5[%c0_9, %c0_10] : memref<1x64xf32, #tpu.memory_space<vmem>>, vector<1x64xf32>
    %11 = vector.broadcast %10 : vector<1x64xf32> to vector<8x64xf32>
    %12 = arith.addf %9, %11 : vector<8x64xf32>
    %13 = arith.negf %12 : vector<8x64xf32>
    %14 = math.exp %13 : vector<8x64xf32>
    %cst_11 = arith.constant 1.000000e+00 : f32
    %15 = vector.broadcast %cst_11 : f32 to vector<8x64xf32>
    %16 = arith.addf %15, %14 : vector<8x64xf32>
    %17 = arith.divf %15, %16 : vector<8x64xf32>
    %c0_12 = arith.constant 0 : index
    %c0_13 = arith.constant 0 : index
    %18 = vector.load %arg6[%c0_12, %c0_13] : memref<64x8xf32, #tpu.memory_space<vmem>>, vector<64x8xf32>
    %cst_14 = arith.constant dense<0.000000e+00> : vector<8x8xf32>
    %19 = tpu.matmul %17, %18, %cst_14 {dimension_numbers = #tpu.dot_dimension_numbers<[1], [0], [0], [1], [0, 0, 1, 1], [], []>} : vector<8x64xf32>, vector<64x8xf32>, vector<8x8xf32> -> vector<8x8xf32>
    %c0_15 = arith.constant 0 : index
    %c0_16 = arith.constant 0 : index
    %20 = vector.load %arg7[%c0_15, %c0_16] : memref<1x8xf32, #tpu.memory_space<vmem>>, vector<1x8xf32>
    %21 = vector.broadcast %20 : vector<1x8xf32> to vector<8x8xf32>
    %22 = arith.addf %19, %21 : vector<8x8xf32>
    %c0_17 = arith.constant 0 : index
    %c0_18 = arith.constant 0 : index
    %23 = vector.load %arg8[%c0_17, %c0_18] : memref<8x8xf32, #tpu.memory_space<vmem>>, vector<8x8xf32>
    tpu.vector_store %arg8[%c0_17, %c0_18], %22 {strides = array<i32>} : memref<8x8xf32, #tpu.memory_space<vmem>>, vector<8x8xf32>,
    return
  }
  func.func @transform_0(%arg0: i32) -> (i32, i32) {
    %c0_i32 = arith.constant 0 : i32
    %c0_i32_0 = arith.constant 0 : i32
    return %arg0, %c0_i32 : i32, i32
  }
  func.func @transform_1(%arg0: i32) -> (i32, i32) {
    %c0_i32 = arith.constant 0 : i32
    %c0_i32_0 = arith.constant 0 : i32
    %c0_i32_1 = arith.constant 0 : i32
    return %c0_i32, %c0_i32_0 : i32, i32
  }
  func.func @transform_2(%arg0: i32) -> (i32, i32) {
    %c0_i32 = arith.constant 0 : i32
    %c0_i32_0 = arith.constant 0 : i32
    %c0_i32_1 = arith.constant 0 : i32
    return %c0_i32, %c0_i32_0 : i32, i32
  }
  func.func @transform_3(%arg0: i32) -> (i32, i32) {
    %c0_i32 = arith.constant 0 : i32
    %c0_i32_0 = arith.constant 0 : i32
    %c0_i32_1 = arith.constant 0 : i32
    return %c0_i32, %c0_i32_0 : i32, i32
  }
  func.func @transform_4(%arg0: i32) -> (i32, i32) {
    %c0_i32 = arith.constant 0 : i32
    %c0_i32_0 = arith.constant 0 : i32
    %c0_i32_1 = arith.constant 0 : i32
    return %c0_i32, %c0_i32_0 : i32, i32
  }
  func.func @transform_5(%arg0: i32) -> (i32, i32) {
    %c0_i32 = arith.constant 0 : i32
    %c0_i32_0 = arith.constant 0 : i32
    %c0_i32_1 = arith.constant 0 : i32
    return %c0_i32, %c0_i32_0 : i32, i32
  }
  func.func @transform_6(%arg0: i32) -> (i32, i32) {
    %c0_i32 = arith.constant 0 : i32
    %c0_i32_0 = arith.constant 0 : i32
    %c0_i32_1 = arith.constant 0 : i32
    return %c0_i32, %c0_i32_0 : i32, i32
  }
  func.func @transform_7(%arg0: i32) -> (i32, i32) {
    %c0_i32 = arith.constant 0 : i32
    %c0_i32_0 = arith.constant 0 : i32
    return %arg0, %c0_i32 : i32, i32
  }
}

</mosaic_0001>

<llo_original>
// kernel: quantumnet_forward.1
$region0: #{quantumnet_forward.1}
  #allocation0 [shape = 'u32[]', space=smem, size = 0x4, offset = 0x4, fixed_abs, tag = 'smem constant byte address 0x4 - core index']
  #allocation1 [shape = 'u32[144,128]{1,0:T(1,128)}', space=vmem, size = 0x12000, scoped, tag = 'internal scratch']
  %s0 = inlined_call_operand.vmem [shape: f32[8,16], index: 0, kind: input, shape index: {}]
  %s1 = inlined_call_operand.vmem [shape: f32[16,64], index: 1, kind: input, shape index: {}]
  %s2 = inlined_call_operand.vmem [shape: f32[1,64], index: 2, kind: input, shape index: {}]
  %s3 = inlined_call_operand.vmem [shape: f32[64,64], index: 3, kind: input, shape index: {}]
  %s4 = inlined_call_operand.vmem [shape: f32[1,64], index: 4, kind: input, shape index: {}]
  %s5 = inlined_call_operand.vmem [shape: f32[64,8], index: 5, kind: input, shape index: {}]
  %s6 = inlined_call_operand.hbm [shape: f32[1,8], index: 6, kind: input, shape index: {}]
  %s7 = inlined_call_operand.hbm [shape: f32[8,8], index: 7, kind: output, shape index: {}]
  %s8 = sld [smem:[#allocation0]]
  $region42: #{quantumnet_forward.1} parent=0
    _
  %s10 = ssub.s32 1, %s8
  %s11 = scalar_select 0, %s10, %s8
  $region1: #{quantumnet_forward.1} parent=0
    #allocation2 [shape = 'u8[512]{0}', space=vmem, size = 0x400, scoped, tag = 'input window, operand 6, single buffered']
    #allocation3 [shape = 's32[1]{0}', space=sflag, size = 0x4, scoped, tag = 'scoped memory for quantumnet_forward.1']
    #allocation4 [shape = 's32[1]{0}', space=sflag, size = 0x4, scoped, tag = 'scoped memory for quantumnet_forward.1']
    #allocation5 [shape = 'u8[4096]{0}', space=vmem, size = 0x1000, scoped, tag = 'output window, operand 0, single buffered']
    %12 = vsyncpa [#allocation3], 0
    %13 = vsyncpa [#allocation4], 0
    // Predicated region
    $region2: #{quantumnet_forward.1} parent=1 // pred_check
      _
    $region3: #{quantumnet_forward.1} parent=1 // pred_check_branch
      %15 = sbr.rel (0) target = $region5
    $region4: #{quantumnet_forward.1} parent=1 // pred_region
      _
    $region5: #{quantumnet_forward.1} parent=1 // pred_fallthru
      _
    // Predicated region
    $region6: #{quantumnet_forward.1} parent=1 // pred_check
      _
    $region7: #{quantumnet_forward.1} parent=1 // pred_check_branch
      %17 = sbr.rel (0) target = $region9
    $region8: #{quantumnet_forward.1} parent=1 // pred_region
      _
    $region9: #{quantumnet_forward.1} parent=1 // pred_fallthru
      _
    // Predicated region
    $region10: #{quantumnet_forward.1} parent=1 // pred_check
      _
    $region11: #{quantumnet_forward.1} parent=1 // pred_check_branch
      %19 = sbr.rel (0) target = $region13
    $region12: #{quantumnet_forward.1} parent=1 // pred_region
      _
    $region13: #{quantumnet_forward.1} parent=1 // pred_fallthru
      _
    // Predicated region
    $region14: #{quantumnet_forward.1} parent=1 // pred_check
      _
    $region15: #{quantumnet_forward.1} parent=1 // pred_check_branch
      %21 = sbr.rel (0) target = $region17
    $region16: #{quantumnet_forward.1} parent=1 // pred_region
      _
    $region17: #{quantumnet_forward.1} parent=1 // pred_fallthru
      _
    // Predicated region
    $region18: #{quantumnet_forward.1} parent=1 // pred_check
      _
    $region19: #{quantumnet_forward.1} parent=1 // pred_check_branch
      %23 = sbr.rel (0) target = $region21
    $region20: #{quantumnet_forward.1} parent=1 // pred_region
      _
    $region21: #{quantumnet_forward.1} parent=1 // pred_fallthru
      _
    // Predicated region
    $region22: #{quantumnet_forward.1} parent=1 // pred_check
      _
    $region23: #{quantumnet_forward.1} parent=1 // pred_check_branch
      %25 = sbr.rel (0) target = $region25
    $region24: #{quantumnet_forward.1} parent=1 // pred_region
      _
    $region25: #{quantumnet_forward.1} parent=1 // pred_fallthru
      _
    // Predicated region
    $region26: #{quantumnet_forward.1} parent=1 // pred_check
      _
    $region27: #{quantumnet_forward.1} parent=1 // pred_check_branch
      %27 = sbr.rel (0) target = $region29
    $region28: #{quantumnet_forward.1} parent=1 // pred_region
      %s29 = ssub.s32 16, 16
      %30 = vsyncadd [#allocation3], %s29
      %s32 = sshll.u32 [#allocation2], 4
      %s33 = int_to_ptr.vmem [resolvable:$true] %s32
      %35 = dma.hbm_to_vmem [thread:$0]  %s6, 16, %s33, [#allocation3]
    $region29: #{quantumnet_forward.1} parent=1 // pred_fallthru
      _
    // Predicated region
    $region30: #{quantumnet_forward.1} parent=1 // pred_check
      _
    $region31: #{quantumnet_forward.1} parent=1 // pred_check_branch
      %37 = sbr.rel (0) target = $region33
    $region32: #{quantumnet_forward.1} parent=1 // pred_region
      %38 = dma.done [#allocation3], 16
    $region33: #{quantumnet_forward.1} parent=1 // pred_fallthru
      _
    %v39 = vld [vmem:[%s0] sm:$0xff]
    %v40 = vld [vmem:[%s1] sm:$0xff]
    %v41 = vld [vmem:[%s1 + $0x8] sm:$0xff]
    %v42 = vld [vmem:[%s2] sm:$0x1]
    %v44 = vlaneseq
    %v45 = vshrl.u32 %v44, 7
    %v46 = vsub.s32 0, %v45
    %v47 = vrot.slane %v42, %v46
    %vm49 = vcmask 130048
    %v51 = vsel %vm49, %v39, 0
    %53 = vmatprep.subr.mxu0 0.0
    %54 = vmatpush1.msra.mxu0 %v40
    %55 = vmatprep.subr.mxu0 0.0
    %56 = vmatpush1.msra.mxu0 %v41
    %57 = vmatprep.subr.mxu0 0.0
    %58 = vmatpush1.msra.mxu0 0.0
    %59 = vmatprep.subr.mxu0 0.0
    %60 = vmatpush1.msra.mxu0 0.0
    %61 = vmatprep.subr.mxu0 0.0
    %62 = vmatpush1.msra.mxu0 0.0
    %63 = vmatprep.subr.mxu0 0.0
    %64 = vmatpush1.msra.mxu0 0.0
    %65 = vmatprep.subr.mxu0 0.0
    %66 = vmatpush1.msra.mxu0 0.0
    %67 = vmatprep.subr.mxu0 0.0
    %68 = vmatpush1.msra.mxu0 0.0
    %69 = vmatprep.subr.mxu0 0.0
    %70 = vmatpush1.msra.mxu0 0.0
    %71 = vmatprep.subr.mxu0 0.0
    %72 = vmatpush1.msra.mxu0 0.0
    %73 = vmatprep.subr.mxu0 0.0
    %74 = vmatpush1.msra.mxu0 0.0
    %75 = vmatprep.subr.mxu0 0.0
    %76 = vmatpush1.msra.mxu0 0.0
    %77 = vmatprep.subr.mxu0 0.0
    %78 = vmatpush1.msra.mxu0 0.0
    %79 = vmatprep.subr.mxu0 0.0
    %80 = vmatpush1.msra.mxu0 0.0
    %81 = vmatprep.subr.mxu0 0.0
    %82 = vmatpush1.msra.mxu0 0.0
    %83 = vmatprep.subr.mxu0 0.0
    %84 = vmatpush1.msra.mxu0 0.0
    %85 = vmatprep.subr.mxu0 0.0
    %86 = vmatpush1.msra.mxu0 0.0
    %87 = vmatprep.subr.mxu0 0.0
    %88 = vmatpush1.msra.mxu0 0.0
    %89 = vmatprep.subr.mxu0 0.0
    %90 = vmatpush1.msra.mxu0 0.0
    %91 = vmatprep.subr.mxu0 0.0
    %92 = vmatpush1.msra.mxu0 0.0
    %93 = vmatprep.subr.mxu0 0.0
    %94 = vmatpush1.msra.mxu0 0.0
    %95 = vmatprep.subr.mxu0 0.0
    %96 = vmatpush1.msra.mxu0 0.0
    %97 = vmatprep.subr.mxu0 0.0
    %98 = vmatpush1.msra.mxu0 0.0
    %99 = vmatprep.subr.mxu0 0.0
    %100 = vmatpush1.msra.mxu0 0.0
    %101 = vmatprep.subr.mxu0 0.0
    %102 = vmatpush1.msra.mxu0 0.0
    %103 = vmatprep.subr.mxu0 0.0
    %104 = vmatpush1.msra.mxu0 0.0
    %105 = vmatprep.subr.mxu0 0.0
    %106 = vmatpush1.msra.mxu0 0.0
    %107 = vmatprep.subr.mxu0 0.0
    %108 = vmatpush1.msra.mxu0 0.0
    %109 = vmatprep.subr.mxu0 0.0
    %110 = vmatpush1.msra.mxu0 0.0
    %111 = vmatprep.subr.mxu0 0.0
    %112 = vmatpush1.msra.mxu0 0.0
    %113 = vmatprep.subr.mxu0 0.0
    %114 = vmatpush1.msra.mxu0 0.0
    %115 = vmatprep.subr.mxu0 0.0
    %116 = vmatpush1.msra.mxu0 0.0
    %117 = vmatprep.mubr.f32.mxu0 0.0
    %118 = vmatmul.mubr.f32.gmra.mrb[0].mxu0 %v51
    %v119 = vpop.f32.mrb[0].mxu0
    %v120 = vadd.f32 %v47, %v119
    %v121 = vpop.f32.mrb[0].mxu0
    %122 = vdwg.mxu0
    %v123 = vmax.f32 %v120, 0.0
    %v124 = vld [vmem:[%s3] sm:$0xff]
    %v125 = vld [vmem:[%s3 + $0x8] sm:$0xff]
    %v126 = vld [vmem:[%s3 + $0x10] sm:$0xff]
    %v127 = vld [vmem:[%s3 + $0x18] sm:$0xff]
    %v128 = vld [vmem:[%s3 + $0x20] sm:$0xff]
    %v129 = vld [vmem:[%s3 + $0x28] sm:$0xff]
    %v130 = vld [vmem:[%s3 + $0x30] sm:$0xff]
    %v131 = vld [vmem:[%s3 + $0x38] sm:$0xff]
    %v132 = vld [vmem:[%s4] sm:$0x1]
    %v134 = vlaneseq
    %v135 = vshrl.u32 %v134, 7
    %v136 = vsub.s32 0, %v135
    %v137 = vrot.slane %v132, %v136
    %vm139 = vcmask 523264
    %v141 = vsel %vm139, %v123, 0
    %143 = vmatprep.subr.mxu0 0.0
    %144 = vmatpush1.msra.mxu0 %v124
    %145 = vmatprep.subr.mxu0 0.0
    %146 = vmatpush1.msra.mxu0 %v125
    %147 = vmatprep.subr.mxu0 0.0
    %148 = vmatpush1.msra.mxu0 %v126
    %149 = vmatprep.subr.mxu0 0.0
    %150 = vmatpush1.msra.mxu0 %v127
    %151 = vmatprep.subr.mxu0 0.0
    %152 = vmatpush1.msra.mxu0 %v128
    %153 = vmatprep.subr.mxu0 0.0
    %154 = vmatpush1.msra.mxu0 %v129
    %155 = vmatprep.subr.mxu0 0.0
    %156 = vmatpush1.msra.mxu0 %v130
    %157 = vmatprep.subr.mxu0 0.0
    %158 = vmatpush1.msra.mxu0 %v131
    %159 = vmatprep.subr.mxu0 0.0
    %160 = vmatpush1.msra.mxu0 0.0
    %161 = vmatprep.subr.mxu0 0.0
    %162 = vmatpush1.msra.mxu0 0.0
    %163 = vmatprep.subr.mxu0 0.0
    %164 = vmatpush1.msra.mxu0 0.0
    %165 = vmatprep.subr.mxu0 0.0
    %166 = vmatpush1.msra.mxu0 0.0
    %167 = vmatprep.subr.mxu0 0.0
    %168 = vmatpush1.msra.mxu0 0.0
    %169 = vmatprep.subr.mxu0 0.0
    %170 = vmatpush1.msra.mxu0 0.0
    %171 = vmatprep.subr.mxu0 0.0
    %172 = vmatpush1.msra.mxu0 0.0
    %173 = vmatprep.subr.mxu0 0.0
    %174 = vmatpush1.msra.mxu0 0.0
    %175 = vmatprep.subr.mxu0 0.0
    %176 = vmatpush1.msra.mxu0 0.0
    %177 = vmatprep.subr.mxu0 0.0
    %178 = vmatpush1.msra.mxu0 0.0
    %179 = vmatprep.subr.mxu0 0.0
    %180 = vmatpush1.msra.mxu0 0.0
    %181 = vmatprep.subr.mxu0 0.0
    %182 = vmatpush1.msra.mxu0 0.0
    %183 = vmatprep.subr.mxu0 0.0
    %184 = vmatpush1.msra.mxu0 0.0
    %185 = vmatprep.subr.mxu0 0.0
    %186 = vmatpush1.msra.mxu0 0.0
    %187 = vmatprep.subr.mxu0 0.0
    %188 = vmatpush1.msra.mxu0 0.0
    %189 = vmatprep.subr.mxu0 0.0
    %190 = vmatpush1.msra.mxu0 0.0
    %191 = vmatprep.subr.mxu0 0.0
    %192 = vmatpush1.msra.mxu0 0.0
    %193 = vmatprep.subr.mxu0 0.0
    %194 = vmatpush1.msra.mxu0 0.0
    %195 = vmatprep.subr.mxu0 0.0
    %196 = vmatpush1.msra.mxu0 0.0
    %197 = vmatprep.subr.mxu0 0.0
    %198 = vmatpush1.msra.mxu0 0.0
    %199 = vmatprep.subr.mxu0 0.0
    %200 = vmatpush1.msra.mxu0 0.0
    %201 = vmatprep.subr.mxu0 0.0
    %202 = vmatpush1.msra.mxu0 0.0
    %203 = vmatprep.subr.mxu0 0.0
    %204 = vmatpush1.msra.mxu0 0.0
    %205 = vmatprep.subr.mxu0 0.0
    %206 = vmatpush1.msra.mxu0 0.0
    %207 = vmatprep.mubr.f32.mxu0 0.0
    %208 = vmatmul.mubr.f32.gmra.mrb[0].mxu0 %v141
    %v209 = vpop.f32.mrb[0].mxu0
    %v210 = vadd.f32 %v137, %v209
    %v211 = vpop.f32.mrb[0].mxu0
    %212 = vdwg.mxu0
    %v213 = vxor.u32 %v210, 2147483648
    %v214 = vmul.f32 %v213, 1.442695
    %v215 = vpow.pop %v214
    %v216 = vadd.f32 %v215, 1.0
    %v217 = vrcp.pop %v216
    %v218 = vmul.f32 1.0, %v217
    %v219 = vld [vmem:[%s5] sm:$0xff]
    %v220 = vld [vmem:[%s5 + $0x8] sm:$0xff]
    %v221 = vld [vmem:[%s5 + $0x10] sm:$0xff]
    %v222 = vld [vmem:[%s5 + $0x18] sm:$0xff]
    %v223 = vld [vmem:[%s5 + $0x20] sm:$0xff]
    %v224 = vld [vmem:[%s5 + $0x28] sm:$0xff]
    %v225 = vld [vmem:[%s5 + $0x30] sm:$0xff]
    %v226 = vld [vmem:[%s5 + $0x38] sm:$0xff]
    %v227 = vld [vmem:[#allocation2] sm:$0x1]
    %v229 = vlaneseq
    %v230 = vshrl.u32 %v229, 7
    %v231 = vsub.s32 0, %v230
    %v232 = vrot.slane %v227, %v231
    %v235 = vsel %vm139, %v218, 0
    %237 = vmatprep.subr.mxu0 0.0
    %238 = vmatpush1.msra.mxu0 %v219
    %239 = vmatprep.subr.mxu0 0.0
    %240 = vmatpush1.msra.mxu0 %v220
    %241 = vmatprep.subr.mxu0 0.0
    %242 = vmatpush1.msra.mxu0 %v221
    %243 = vmatprep.subr.mxu0 0.0
    %244 = vmatpush1.msra.mxu0 %v222
    %245 = vmatprep.subr.mxu0 0.0
    %246 = vmatpush1.msra.mxu0 %v223
    %247 = vmatprep.subr.mxu0 0.0
    %248 = vmatpush1.msra.mxu0 %v224
    %249 = vmatprep.subr.mxu0 0.0
    %250 = vmatpush1.msra.mxu0 %v225
    %251 = vmatprep.subr.mxu0 0.0
    %252 = vmatpush1.msra.mxu0 %v226
    %253 = vmatprep.subr.mxu0 0.0
    %254 = vmatpush1.msra.mxu0 0.0
    %255 = vmatprep.subr.mxu0 0.0
    %256 = vmatpush1.msra.mxu0 0.0
    %257 = vmatprep.subr.mxu0 0.0
    %258 = vmatpush1.msra.mxu0 0.0
    %259 = vmatprep.subr.mxu0 0.0
    %260 = vmatpush1.msra.mxu0 0.0
    %261 = vmatprep.subr.mxu0 0.0
    %262 = vmatpush1.msra.mxu0 0.0
    %263 = vmatprep.subr.mxu0 0.0
    %264 = vmatpush1.msra.mxu0 0.0
    %265 = vmatprep.subr.mxu0 0.0
    %266 = vmatpush1.msra.mxu0 0.0
    %267 = vmatprep.subr.mxu0 0.0
    %268 = vmatpush1.msra.mxu0 0.0
    %269 = vmatprep.subr.mxu0 0.0
    %270 = vmatpush1.msra.mxu0 0.0
    %271 = vmatprep.subr.mxu0 0.0
    %272 = vmatpush1.msra.mxu0 0.0
    %273 = vmatprep.subr.mxu0 0.0
    %274 = vmatpush1.msra.mxu0 0.0
    %275 = vmatprep.subr.mxu0 0.0
    %276 = vmatpush1.msra.mxu0 0.0
    %277 = vmatprep.subr.mxu0 0.0
    %278 = vmatpush1.msra.mxu0 0.0
    %279 = vmatprep.subr.mxu0 0.0
    %280 = vmatpush1.msra.mxu0 0.0
    %281 = vmatprep.subr.mxu0 0.0
    %282 = vmatpush1.msra.mxu0 0.0
    %283 = vmatprep.subr.mxu0 0.0
    %284 = vmatpush1.msra.mxu0 0.0
    %285 = vmatprep.subr.mxu0 0.0
    %286 = vmatpush1.msra.mxu0 0.0
    %287 = vmatprep.subr.mxu0 0.0
    %288 = vmatpush1.msra.mxu0 0.0
    %289 = vmatprep.subr.mxu0 0.0
    %290 = vmatpush1.msra.mxu0 0.0
    %291 = vmatprep.subr.mxu0 0.0
    %292 = vmatpush1.msra.mxu0 0.0
    %293 = vmatprep.subr.mxu0 0.0
    %294 = vmatpush1.msra.mxu0 0.0
    %295 = vmatprep.subr.mxu0 0.0
    %296 = vmatpush1.msra.mxu0 0.0
    %297 = vmatprep.subr.mxu0 0.0
    %298 = vmatpush1.msra.mxu0 0.0
    %299 = vmatprep.subr.mxu0 0.0
    %300 = vmatpush1.msra.mxu0 0.0
    %301 = vmatprep.mubr.f32.mxu0 0.0
    %302 = vmatmul.mubr.f32.gmra.mrb[0].mxu0 %v235
    %v303 = vpop.f32.mrb[0].mxu0
    %v304 = vadd.f32 %v232, %v303
    %v305 = vpop.f32.mrb[0].mxu0
    %306 = vdwg.mxu0
    %vm307 = vcmask 64512
    %308 = vst.msk [vmem:[#allocation5] sm:$0xff] %vm307, %v304
    // Predicated region
    $region34: #{quantumnet_forward.1} parent=1 // pred_check
      _
    $region35: #{quantumnet_forward.1} parent=1 // pred_check_branch
      %310 = sbr.rel (0) target = $region37
    $region36: #{quantumnet_forward.1} parent=1 // pred_region
      %s312 = ssub.s32 128, 128
      %313 = vsyncadd [#allocation4], %s312
      %s315 = sshll.u32 [#allocation5], 4
      %s316 = int_to_ptr.vmem [resolvable:$true] %s315
      %318 = dma.vmem_to_hbm [thread:$0]  %s316, 128, %s7, [#allocation4]
    $region37: #{quantumnet_forward.1} parent=1 // pred_fallthru
      _
    // Predicated region
    $region38: #{quantumnet_forward.1} parent=1 // pred_check
      _
    $region39: #{quantumnet_forward.1} parent=1 // pred_check_branch
      %320 = sbr.rel (0) target = $region41
    $region40: #{quantumnet_forward.1} parent=1 // pred_region
      %321 = dma.done [#allocation4], 128
    $region41: #{quantumnet_forward.1} parent=1 // pred_fallthru
      _
    %322 = vsyncpa [#allocation3], 1
    %323 = vsyncpa [#allocation4], 1

</llo_original>
